<compile_context>
chip_gen: v5e
topology: v5e:2x2
jax: 0.10.0
libtpu: 0.0.40
codegen_flags: <defaults>
</compile_context>

<pallas_src>
import functools

import jax
import jax.numpy as jnp
import numpy as np
from jax.experimental import pallas as pl
from jax.experimental.pallas import tpu as pltpu


def _round_up(a: int, b: int) -> int:
    return ((a + b - 1) // b) * b


def _vmem_budget_bytes() -> int:
    """Per-generation usable-VMEM budget (~3/4 of capacity; safe fallback)."""
    cap = 64 * 1024 * 1024          # conservative fallback (v7x-sized)
    try:
        cap = int(pltpu.get_tpu_info().vmem_capacity_bytes)
    except Exception:
        pass
    return (cap * 3) // 4           # ~48 MiB on v7x, ~96 MiB on v5e/v6e


def _bn_kernel(x_ref, gamma_ref, beta_ref, o_ref,
               sum_ref, sumsq_ref, scale_ref, shift_ref, *,
               inv_n: float, k: int, group: int, eps: float,
               rows_total: int, tile_rows: int, needs_mask: bool):
    phase = pl.program_id(0)   # 0: accumulate stats, 1: normalize
    step = pl.program_id(1)    # row-tile index
    cf = x_ref.shape[-1]

    @pl.when(jnp.logical_and(phase == 0, step == 0))
    def _init():
        sum_ref[...] = jnp.zeros_like(sum_ref)
        sumsq_ref[...] = jnp.zeros_like(sumsq_ref)

    @pl.when(phase == 0)
    def _accumulate():
        x = x_ref[...].astype(jnp.float32)                    # (tile_rows, Cf)
        if needs_mask:
            # Ragged last tile: rows past the array edge are unspecified;
            # zero them BEFORE any arithmetic so they add nothing.
            rows_valid = rows_total - step * tile_rows
            ridx = jax.lax.broadcasted_iota(jnp.int32, x.shape, 0)
            x = jnp.where(ridx < rows_valid, x, 0.0)
        if tile_rows % 8 == 0:
            # (8, Cf) partial accumulators: pure vreg-wise adds per tile;
            # the 8->1 sublane reduction happens once in the finalize step.
            x3 = x.reshape(tile_rows // 8, 8, cf)
            sum_ref[...] += jnp.sum(x3, axis=0)
            sumsq_ref[...] += jnp.sum(x3 * x3, axis=0)
        else:
            sum_ref[...] += jnp.sum(x, axis=0, keepdims=True)
            sumsq_ref[...] += jnp.sum(x * x, axis=0, keepdims=True)

    @pl.when(jnp.logical_and(phase == 1, step == 0))
    def _finalize_stats():
        s = sum_ref[...]                                      # (part_rows, Cf)
        ss = sumsq_ref[...]
        if k > 1:
            # Combine the k time-folded lane groups (lanes periodic with
            # period `group` = C) with a tiny mod-equality matmul; the result
            # is the per-channel total already broadcast to the folded layout.
            a = jax.lax.broadcasted_iota(jnp.int32, (cf, cf), 0) % group
            b = jax.lax.broadcasted_iota(jnp.int32, (cf, cf), 1) % group
            comb = (a == b).astype(jnp.float32)
            s = jnp.dot(s, comb, preferred_element_type=jnp.float32)
            ss = jnp.dot(ss, comb, preferred_element_type=jnp.float32)
        if s.shape[0] > 1:
            s = jnp.sum(s, axis=0, keepdims=True)             # (1, Cf)
            ss = jnp.sum(ss, axis=0, keepdims=True)
        mean = s * inv_n
        # Clamp: E[x^2] - mean^2 can go slightly negative in f32.
        var = jnp.maximum(ss * inv_n - mean * mean, 0.0)      # biased variance
        inv_std = jax.lax.rsqrt(var + eps)
        scale = gamma_ref[...].astype(jnp.float32) * inv_std
        scale_ref[...] = scale
        shift_ref[...] = beta_ref[...].astype(jnp.float32) - mean * scale

    @pl.when(phase == 1)
    def _normalize():
        x = x_ref[...].astype(jnp.float32)
        o_ref[...] = (x * scale_ref[...] + shift_ref[...]).astype(o_ref.dtype)


def batchnorm_feature_last(x, gamma, beta, eps: float = 1e-5,
                           max_block_bytes: int = 4 * 1024 * 1024,
                           vmem_budget_bytes: int | None = None):
    """BatchNorm over the last (feature) dim of a (B, T, C) tensor."""
    assert x.ndim == 3
    B, T, C = x.shape
    N = B * T
    gamma = jnp.asarray(gamma).reshape(1, C)
    beta = jnp.asarray(beta).reshape(1, C)

    itemsize = np.dtype(x.dtype).itemsize
    sub = {4: 8, 2: 16, 1: 32}.get(itemsize, 8)   # dtype-native sublane multiple

    # --- lane-density folding (free, metadata-only reshape) ---
    k = 1
    if C < 128 and 128 % C == 0 and N % (128 // C) == 0:
        k = 128 // C
    Cf = k * C
    R = N // k

    x2 = x.reshape(R, Cf)                                   # contiguous -> free
    gamma_f = jnp.tile(gamma, (1, k)) if k > 1 else gamma
    beta_f = jnp.tile(beta, (1, k)) if k > 1 else beta

    hw_budget = _vmem_budget_bytes()
    budget = int(vmem_budget_bytes) if vmem_budget_bytes is not None else hw_budget

    row_bytes = Cf * itemsize
    full_bytes = R * row_bytes
    full_f32_bytes = R * Cf * 4

    # --- resident fast path: whole x/y stay in VMEM, x DMA'd once ---
    # Count double-buffered in+out blocks plus f32 temporaries + headroom.
    if 4 * full_bytes + 2 * full_f32_bytes + (2 << 20) <= budget:
        tile_rows, nt = R, 1          # block == full array dims (always legal)
    else:
        rows_budget = max(sub, (max_block_bytes // max(row_bytes, 1)) // sub * sub)
        nt = max(1, -(-R // rows_budget))
        tile_rows = _round_up(-(-R // nt), sub)
        if tile_rows >= R:
            tile_rows, nt = R, 1
        else:
            nt = -(-R // tile_rows)
    needs_mask = (R % tile_rows) != 0
    part_rows = 8 if tile_rows % 8 == 0 else 1

    tile_bytes = tile_rows * row_bytes
    tile_f32_bytes = tile_rows * Cf * 4
    footprint = (4 * tile_bytes + 2 * tile_f32_bytes
                 + 4 * int(gamma_f.size) * int(np.dtype(gamma_f.dtype).itemsize)
                 + (2 * part_rows + 2) * Cf * 4)
    vmem_limit = int(min(max(32 << 20, footprint + (8 << 20)),
                         max(hw_budget, 32 << 20)))

    kernel = functools.partial(
        _bn_kernel, inv_n=1.0 / float(N), k=k, group=C, eps=float(eps),
        rows_total=R, tile_rows=tile_rows, needs_mask=needs_mask)

    reads = full_bytes if nt == 1 else 2 * full_bytes
    cost = pl.CostEstimate(
        flops=5 * N * C,                 # ~3/elem stats pass + 2/elem FMA pass
        transcendentals=C,               # rsqrt per channel
        bytes_accessed=int(reads + full_bytes + 4 * Cf * 4),
    )

    y2 = pl.pallas_call(
        kernel,
        out_shape=jax.ShapeDtypeStruct((R, Cf), x.dtype),
        grid_spec=pltpu.PrefetchScalarGridSpec(
            num_scalar_prefetch=0,
            grid=(2, nt),                                    # (phase, row tile)
            in_specs=[
                pl.BlockSpec((tile_rows, Cf), lambda p, i: (i, 0)),
                pl.BlockSpec((1, Cf), lambda p, i: (0, 0)),  # gamma: resident
                pl.BlockSpec((1, Cf), lambda p, i: (0, 0)),  # beta: resident
            ],
            # Phase 0 pins the output block index to 0 -> the (uninitialized)
            # output block is never flushed before phase 1 step 0 writes it;
            # phase 1 then writes each tile exactly once.
            out_specs=pl.BlockSpec((tile_rows, Cf), lambda p, i: (i * p, 0)),
            scratch_shapes=[
                pltpu.VMEM((part_rows, Cf), jnp.float32),    # sum partials
                pltpu.VMEM((part_rows, Cf), jnp.float32),    # sumsq partials
                pltpu.VMEM((1, Cf), jnp.float32),            # scale
                pltpu.VMEM((1, Cf), jnp.float32),            # shift
            ],
        ),
        compiler_params=pltpu.CompilerParams(
            dimension_semantics=("arbitrary", "arbitrary"),
            vmem_limit_bytes=vmem_limit,
        ),
        cost_estimate=cost,
    )(x2, gamma_f, beta_f)

    return y2.reshape(B, T, C)           # contiguous -> free


def _reference(x, gamma, beta, eps=1e-5):
    x32 = x.astype(jnp.float32)
    mean = jnp.mean(x32, axis=(0, 1), keepdims=True)
    var = jnp.mean((x32 - mean) ** 2, axis=(0, 1), keepdims=True)
    y = (x32 - mean) * jax.lax.rsqrt(var + eps)
    g = jnp.asarray(gamma).reshape(1, 1, -1)
    b = jnp.asarray(beta).reshape(1, 1, -1)
    return (y * g + b).astype(x.dtype)


if __name__ == "__main__":
    key = jax.random.PRNGKey(0)
    k1, k2, k3, k4, k5 = jax.random.split(key, 5)

    # Case 1: BatchNorm(num_features=32, feature_dim=-1) with module-default
    # affine (gamma=1, beta=0); folded lane layout, resident-x fast path.
    B, T, C = 2, 8, 32
    x = jax.random.normal(k1, (B, T, C), dtype=jnp.float32)
    gamma = jnp.ones((C,), dtype=jnp.float32)
    beta = jnp.zeros((C,), dtype=jnp.float32)
    out = jax.block_until_ready(batchnorm_feature_last(x, gamma, beta))
    ref = _reference(x, gamma, beta)
    np.testing.assert_allclose(np.asarray(out), np.asarray(ref),
                               atol=1e-5, rtol=1e-5)

    # Case 2: non-foldable N (fallback Cf=C), non-multiple-of-8 rows,
    # non-trivial affine params.
    B2, T2, C2 = 3, 50, 32
    x2 = jax.random.normal(k2, (B2, T2, C2), dtype=jnp.float32)
    gamma2 = 1.0 + 0.1 * jax.random.normal(k3, (C2,), dtype=jnp.float32)
    beta2 = 0.1 * jax.random.normal(k4, (C2,), dtype=jnp.float32)
    out2 = jax.block_until_ready(batchnorm_feature_last(x2, gamma2, beta2))
    ref2 = _reference(x2, gamma2, beta2)
    np.testing.assert_allclose(np.asarray(out2), np.asarray(ref2),
                               atol=1e-5, rtol=1e-5)

    # Case 3: force the multi-tile path with a ragged last tile (tiny budget
    # override) while keeping the shape small: exercises in-kernel masking.
    B3, T3, C3 = 2, 334, 32
    x3 = jax.random.normal(k5, (B3, T3, C3), dtype=jnp.float32)
    gamma3 = jnp.ones((C3,), dtype=jnp.float32)
    beta3 = jnp.zeros((C3,), dtype=jnp.float32)
    out3 = jax.block_until_ready(batchnorm_feature_last(
        x3, gamma3, beta3, max_block_bytes=16 * 1024,
        vmem_budget_bytes=64 * 1024))
    ref3 = _reference(x3, gamma3, beta3)
    np.testing.assert_allclose(np.asarray(out3), np.asarray(ref3),
                               atol=1e-5, rtol=1e-5)

    print("KERNEL_OK")
</pallas_src>

<mosaic_0001>
module attributes {stable_mosaic.version = 11 : i64} {
  func.func @_bn_kernel(%arg0: i32, %arg1: i32, %arg2: memref<4x128xf32, #tpu.memory_space<vmem>>, %arg3: memref<1x128xf32, #tpu.memory_space<vmem>>, %arg4: memref<1x128xf32, #tpu.memory_space<vmem>>, %arg5: memref<4x128xf32, #tpu.memory_space<vmem>>, %arg6: memref<1x128xf32, #tpu.memory_space<vmem>>, %arg7: memref<1x128xf32, #tpu.memory_space<vmem>>, %arg8: memref<1x128xf32, #tpu.memory_space<vmem>>, %arg9: memref<1x128xf32, #tpu.memory_space<vmem>>) attributes {dimension_semantics = [#tpu.dimension_semantics<arbitrary>, #tpu.dimension_semantics<arbitrary>], iteration_bounds = array<i64: 2, 1>, scalar_prefetch = 0 : i64, scratch_operands = 4 : i64, tpu.core_type = #tpu.core_type<tc>, window_params = [{transform_indices = @transform_0, window_bounds = array<i64: 4, 128>}, {pipeline_mode = #tpu.pipeline_mode<synchronous>, transform_indices = @transform_1, window_bounds = array<i64: 1, 128>}, {pipeline_mode = #tpu.pipeline_mode<synchronous>, transform_indices = @transform_2, window_bounds = array<i64: 1, 128>}, {transform_indices = @transform_3, window_bounds = array<i64: 4, 128>}]} {
    %c0_i32 = arith.constant 0 : i32
    %0 = arith.cmpi eq, %arg0, %c0_i32 : i32
    %c0_i32_0 = arith.constant 0 : i32
    %1 = arith.cmpi eq, %arg1, %c0_i32_0 : i32
    %2 = arith.andi %0, %1 : i1
    %3 = arith.extui %2 : i1 to i32
    %c0_i32_1 = arith.constant 0 : i32
    %4 = arith.cmpi ne, %3, %c0_i32_1 : i32
    scf.if %4 {
      %cst = arith.constant 0.000000e+00 : f32
      %16 = vector.broadcast %cst : f32 to vector<1x128xf32>
      %c0 = arith.constant 0 : index
      %c0_8 = arith.constant 0 : index
      %17 = vector.load %arg6[%c0, %c0_8] : memref<1x128xf32, #tpu.memory_space<vmem>>, vector<1x128xf32>
      tpu.vector_store %arg6[%c0, %c0_8], %16 {strides = array<i32>} : memref<1x128xf32, #tpu.memory_space<vmem>>, vector<1x128xf32>,
      %cst_9 = arith.constant 0.000000e+00 : f32
      %18 = vector.broadcast %cst_9 : f32 to vector<1x128xf32>
      %c0_10 = arith.constant 0 : index
      %c0_11 = arith.constant 0 : index
      %19 = vector.load %arg7[%c0_10, %c0_11] : memref<1x128xf32, #tpu.memory_space<vmem>>, vector<1x128xf32>
      tpu.vector_store %arg7[%c0_10, %c0_11], %18 {strides = array<i32>} : memref<1x128xf32, #tpu.memory_space<vmem>>, vector<1x128xf32>,
    } else {
    }
    %c0_i32_2 = arith.constant 0 : i32
    %5 = arith.cmpi eq, %arg0, %c0_i32_2 : i32
    %6 = arith.extui %5 : i1 to i32
    %c0_i32_3 = arith.constant 0 : i32
    %7 = arith.cmpi ne, %6, %c0_i32_3 : i32
    scf.if %7 {
      %c0 = arith.constant 0 : index
      %c0_8 = arith.constant 0 : index
      %16 = vector.load %arg2[%c0, %c0_8] : memref<4x128xf32, #tpu.memory_space<vmem>>, vector<4x128xf32>
      %c0_9 = arith.constant 0 : index
      %c0_10 = arith.constant 0 : index
      %17 = vector.load %arg6[%c0_9, %c0_10] : memref<1x128xf32, #tpu.memory_space<vmem>>, vector<1x128xf32>
      %cst = arith.constant dense<0.000000e+00> : vector<128xf32>
      %18 = vector.multi_reduction <add>, %16, %cst [0] : vector<4x128xf32> to vector<128xf32>
      %19 = vector.shape_cast %18 : vector<128xf32> to vector<1x128xf32>
      %20 = arith.addf %17, %19 : vector<1x128xf32>
      %c0_11 = arith.constant 0 : index
      %c0_12 = arith.constant 0 : index
      %21 = vector.load %arg6[%c0_11, %c0_12] : memref<1x128xf32, #tpu.memory_space<vmem>>, vector<1x128xf32>
      tpu.vector_store %arg6[%c0_11, %c0_12], %20 {strides = array<i32>} : memref<1x128xf32, #tpu.memory_space<vmem>>, vector<1x128xf32>,
      %c0_13 = arith.constant 0 : index
      %c0_14 = arith.constant 0 : index
      %22 = vector.load %arg7[%c0_13, %c0_14] : memref<1x128xf32, #tpu.memory_space<vmem>>, vector<1x128xf32>
      %23 = arith.mulf %16, %16 : vector<4x128xf32>
      %cst_15 = arith.constant dense<0.000000e+00> : vector<128xf32>
      %24 = vector.multi_reduction <add>, %23, %cst_15 [0] : vector<4x128xf32> to vector<128xf32>
      %25 = vector.shape_cast %24 : vector<128xf32> to vector<1x128xf32>
      %26 = arith.addf %22, %25 : vector<1x128xf32>
      %c0_16 = arith.constant 0 : index
      %c0_17 = arith.constant 0 : index
      %27 = vector.load %arg7[%c0_16, %c0_17] : memref<1x128xf32, #tpu.memory_space<vmem>>, vector<1x128xf32>
      tpu.vector_store %arg7[%c0_16, %c0_17], %26 {strides = array<i32>} : memref<1x128xf32, #tpu.memory_space<vmem>>, vector<1x128xf32>,
    } else {
    }
    %c1_i32 = arith.constant 1 : i32
    %8 = arith.cmpi eq, %arg0, %c1_i32 : i32
    %c0_i32_4 = arith.constant 0 : i32
    %9 = arith.cmpi eq, %arg1, %c0_i32_4 : i32
    %10 = arith.andi %8, %9 : i1
    %11 = arith.extui %10 : i1 to i32
    %c0_i32_5 = arith.constant 0 : i32
    %12 = arith.cmpi ne, %11, %c0_i32_5 : i32
    scf.if %12 {
      %c0 = arith.constant 0 : index
      %c0_8 = arith.constant 0 : index
      %16 = vector.load %arg6[%c0, %c0_8] : memref<1x128xf32, #tpu.memory_space<vmem>>, vector<1x128xf32>
      %c0_9 = arith.constant 0 : index
      %c0_10 = arith.constant 0 : index
      %17 = vector.load %arg7[%c0_9, %c0_10] : memref<1x128xf32, #tpu.memory_space<vmem>>, vector<1x128xf32>
      %18 = tpu.iota {dimensions = array<i32: 0>} : vector<128x128xi32>
      %c32_i32 = arith.constant 32 : i32
      %c0_i32_11 = arith.constant 0 : i32
      %19 = arith.cmpi eq, %c32_i32, %c0_i32_11 : i32
      %c1_i32_12 = arith.constant 1 : i32
      %20 = arith.select %19, %c1_i32_12, %c32_i32 : i32
      %21 = vector.broadcast %20 : i32 to vector<128x128xi32>
      %22 = arith.remsi %18, %21 : vector<128x128xi32>
      %c0_i32_13 = arith.constant 0 : i32
      %23 = vector.broadcast %c0_i32_13 : i32 to vector<128x128xi32>
      %24 = arith.cmpi ne, %22, %23 : vector<128x128xi32>
      %c0_i32_14 = arith.constant 0 : i32
      %25 = vector.broadcast %c0_i32_14 : i32 to vector<128x128xi32>
      %26 = arith.cmpi slt, %22, %25 : vector<128x128xi32>
      %c0_i32_15 = arith.constant 0 : i32
      %27 = arith.cmpi slt, %20, %c0_i32_15 : i32
      %28 = vector.broadcast %27 : i1 to vector<128x128xi1>
      %29 = vector.broadcast %28 : vector<128x128xi1> to vector<128x128xi1>
      %30 = arith.xori %26, %29 : vector<128x128xi1>
      %31 = arith.andi %30, %24 : vector<128x128xi1>
      %32 = vector.broadcast %20 : i32 to vector<128x128xi32>
      %33 = arith.addi %22, %32 : vector<128x128xi32>
      %34 = arith.select %31, %33, %22 : vector<128x128xi1>, vector<128x128xi32>
      %35 = tpu.iota {dimensions = array<i32: 1>} : vector<128x128xi32>
      %c32_i32_16 = arith.constant 32 : i32
      %c0_i32_17 = arith.constant 0 : i32
      %36 = arith.cmpi eq, %c32_i32_16, %c0_i32_17 : i32
      %c1_i32_18 = arith.constant 1 : i32
      %37 = arith.select %36, %c1_i32_18, %c32_i32_16 : i32
      %38 = vector.broadcast %37 : i32 to vector<128x128xi32>
      %39 = arith.remsi %35, %38 : vector<128x128xi32>
      %c0_i32_19 = arith.constant 0 : i32
      %40 = vector.broadcast %c0_i32_19 : i32 to vector<128x128xi32>
      %41 = arith.cmpi ne, %39, %40 : vector<128x128xi32>
      %c0_i32_20 = arith.constant 0 : i32
      %42 = vector.broadcast %c0_i32_20 : i32 to vector<128x128xi32>
      %43 = arith.cmpi slt, %39, %42 : vector<128x128xi32>
      %c0_i32_21 = arith.constant 0 : i32
      %44 = arith.cmpi slt, %37, %c0_i32_21 : i32
      %45 = vector.broadcast %44 : i1 to vector<128x128xi1>
      %46 = vector.broadcast %45 : vector<128x128xi1> to vector<128x128xi1>
      %47 = arith.xori %43, %46 : vector<128x128xi1>
      %48 = arith.andi %47, %41 : vector<128x128xi1>
      %49 = vector.broadcast %37 : i32 to vector<128x128xi32>
      %50 = arith.addi %39, %49 : vector<128x128xi32>
      %51 = arith.select %48, %50, %39 : vector<128x128xi1>, vector<128x128xi32>
      %52 = arith.cmpi eq, %34, %51 : vector<128x128xi32>
      %53 = arith.extui %52 : vector<128x128xi1> to vector<128x128xi32>
      %54 = arith.sitofp %53 : vector<128x128xi32> to vector<128x128xf32>
      %cst = arith.constant dense<0.000000e+00> : vector<1x128xf32>
      %55 = tpu.matmul %16, %54, %cst {dimension_numbers = #tpu.dot_dimension_numbers<[1], [0], [0], [1], [0, 0, 1, 1], [], []>} : vector<1x128xf32>, vector<128x128xf32>, vector<1x128xf32> -> vector<1x128xf32>
      %cst_22 = arith.constant dense<0.000000e+00> : vector<1x128xf32>
      %56 = tpu.matmul %17, %54, %cst_22 {dimension_numbers = #tpu.dot_dimension_numbers<[1], [0], [0], [1], [0, 0, 1, 1], [], []>} : vector<1x128xf32>, vector<128x128xf32>, vector<1x128xf32> -> vector<1x128xf32>
      %cst_23 = arith.constant 6.250000e-02 : f32
      %57 = vector.broadcast %cst_23 : f32 to vector<1x128xf32>
      %58 = arith.mulf %55, %57 : vector<1x128xf32>
      %cst_24 = arith.constant 6.250000e-02 : f32
      %59 = vector.broadcast %cst_24 : f32 to vector<1x128xf32>
      %60 = arith.mulf %56, %59 : vector<1x128xf32>
      %61 = arith.mulf %58, %58 : vector<1x128xf32>
      %62 = arith.subf %60, %61 : vector<1x128xf32>
      %cst_25 = arith.constant 0.000000e+00 : f32
      %63 = vector.broadcast %cst_25 : f32 to vector<1x128xf32>
      %64 = arith.maximumf %62, %63 : vector<1x128xf32>
      %cst_26 = arith.constant 9.99999974E-6 : f32
      %65 = vector.broadcast %cst_26 : f32 to vector<1x128xf32>
      %66 = arith.addf %64, %65 : vector<1x128xf32>
      %67 = math.rsqrt %66 : vector<1x128xf32>
      %c0_27 = arith.constant 0 : index
      %c0_28 = arith.constant 0 : index
      %68 = vector.load %arg3[%c0_27, %c0_28] : memref<1x128xf32, #tpu.memory_space<vmem>>, vector<1x128xf32>
      %69 = arith.mulf %68, %67 : vector<1x128xf32>
      %c0_29 = arith.constant 0 : index
      %c0_30 = arith.constant 0 : index
      %70 = vector.load %arg8[%c0_29, %c0_30] : memref<1x128xf32, #tpu.memory_space<vmem>>, vector<1x128xf32>
      tpu.vector_store %arg8[%c0_29, %c0_30], %69 {strides = array<i32>} : memref<1x128xf32, #tpu.memory_space<vmem>>, vector<1x128xf32>,
      %c0_31 = arith.constant 0 : index
      %c0_32 = arith.constant 0 : index
      %71 = vector.load %arg4[%c0_31, %c0_32] : memref<1x128xf32, #tpu.memory_space<vmem>>, vector<1x128xf32>
      %72 = arith.mulf %58, %69 : vector<1x128xf32>
      %73 = arith.subf %71, %72 : vector<1x128xf32>
      %c0_33 = arith.constant 0 : index
      %c0_34 = arith.constant 0 : index
      %74 = vector.load %arg9[%c0_33, %c0_34] : memref<1x128xf32, #tpu.memory_space<vmem>>, vector<1x128xf32>
      tpu.vector_store %arg9[%c0_33, %c0_34], %73 {strides = array<i32>} : memref<1x128xf32, #tpu.memory_space<vmem>>, vector<1x128xf32>,
    } else {
    }
    %c1_i32_6 = arith.constant 1 : i32
    %13 = arith.cmpi eq, %arg0, %c1_i32_6 : i32
    %14 = arith.extui %13 : i1 to i32
    %c0_i32_7 = arith.constant 0 : i32
    %15 = arith.cmpi ne, %14, %c0_i32_7 : i32
    scf.if %15 {
      %c0 = arith.constant 0 : index
      %c0_8 = arith.constant 0 : index
      %16 = vector.load %arg2[%c0, %c0_8] : memref<4x128xf32, #tpu.memory_space<vmem>>, vector<4x128xf32>
      %c0_9 = arith.constant 0 : index
      %c0_10 = arith.constant 0 : index
      %17 = vector.load %arg8[%c0_9, %c0_10] : memref<1x128xf32, #tpu.memory_space<vmem>>, vector<1x128xf32>
      %18 = vector.broadcast %17 : vector<1x128xf32> to vector<4x128xf32>
      %19 = arith.mulf %16, %18 : vector<4x128xf32>
      %c0_11 = arith.constant 0 : index
      %c0_12 = arith.constant 0 : index
      %20 = vector.load %arg9[%c0_11, %c0_12] : memref<1x128xf32, #tpu.memory_space<vmem>>, vector<1x128xf32>
      %21 = vector.broadcast %20 : vector<1x128xf32> to vector<4x128xf32>
      %22 = arith.addf %19, %21 : vector<4x128xf32>
      %c0_13 = arith.constant 0 : index
      %c0_14 = arith.constant 0 : index
      %23 = vector.load %arg5[%c0_13, %c0_14] : memref<4x128xf32, #tpu.memory_space<vmem>>, vector<4x128xf32>
      tpu.vector_store %arg5[%c0_13, %c0_14], %22 {strides = array<i32>} : memref<4x128xf32, #tpu.memory_space<vmem>>, vector<4x128xf32>,
    } else {
    }
    return
  }
  func.func @transform_0(%arg0: i32, %arg1: i32) -> (i32, i32) {
    %c0_i32 = arith.constant 0 : i32
    %c0_i32_0 = arith.constant 0 : i32
    return %arg1, %c0_i32 : i32, i32
  }
  func.func @transform_1(%arg0: i32, %arg1: i32) -> (i32, i32) {
    %c0_i32 = arith.constant 0 : i32
    %c0_i32_0 = arith.constant 0 : i32
    %c0_i32_1 = arith.constant 0 : i32
    return %c0_i32, %c0_i32_0 : i32, i32
  }
  func.func @transform_2(%arg0: i32, %arg1: i32) -> (i32, i32) {
    %c0_i32 = arith.constant 0 : i32
    %c0_i32_0 = arith.constant 0 : i32
    %c0_i32_1 = arith.constant 0 : i32
    return %c0_i32, %c0_i32_0 : i32, i32
  }
  func.func @transform_3(%arg0: i32, %arg1: i32) -> (i32, i32) {
    %0 = arith.muli %arg1, %arg0 : i32
    %c0_i32 = arith.constant 0 : i32
    %c0_i32_0 = arith.constant 0 : i32
    return %0, %c0_i32 : i32, i32
  }
}

</mosaic_0001>

<llo_original>
// kernel: tpu_custom_call.1
$region0: #{tpu_custom_call.1}
  #allocation0 [shape = 'u32[]', space=smem, size = 0x4, offset = 0x4, fixed_abs, tag = 'smem constant byte address 0x4 - core index']
  #allocation1 [shape = 'u32[72,128]{1,0:T(1,128)}', space=vmem, size = 0x9000, scoped, tag = 'internal scratch']
  #allocation2 [shape = 'f32[1,128]{1,0:T(1,128)}', space=vmem, size = 0x200, scoped, tag = 'scratch operand']
  #allocation3 [shape = 'f32[1,128]{1,0:T(1,128)}', space=vmem, size = 0x200, scoped, tag = 'scratch operand']
  #allocation4 [shape = 'f32[1,128]{1,0:T(1,128)}', space=vmem, size = 0x200, scoped, tag = 'scratch operand']
  #allocation5 [shape = 'f32[1,128]{1,0:T(1,128)}', space=vmem, size = 0x200, scoped, tag = 'scratch operand']
  %s0 = inlined_call_operand.hbm [shape: f32[4,128], index: 0, kind: input, shape index: {}]
  %s1 = inlined_call_operand.hbm [shape: f32[1,128], index: 1, kind: input, shape index: {}]
  %s2 = inlined_call_operand.vmem [shape: f32[1,128], index: 2, kind: input, shape index: {}]
  %s3 = inlined_call_operand.hbm [shape: f32[4,128], index: 3, kind: output, shape index: {}]
  %s4 = sld [smem:[#allocation0]]
  $region69: #{tpu_custom_call.1} parent=0
    _
  %s6 = ssub.s32 1, %s4
  %s7 = scalar_select 0, %s6, %s4
  $region1: #{tpu_custom_call.1} parent=0
    #allocation6 [shape = 'u8[2048]{0}', space=vmem, size = 0x800, scoped, tag = 'input window, operand 0, single buffered']
    #allocation7 [shape = 's32[2]{0}', space=sflag, size = 0x8, scoped, tag = 'scoped memory for tpu_custom_call.1']
    #allocation8 [shape = 's32[2]{0}', space=sflag, size = 0x8, scoped, tag = 'scoped memory for tpu_custom_call.1']
    #allocation9 [shape = 'u8[512]{0}', space=vmem, size = 0x400, scoped, tag = 'input window, operand 1, single buffered']
    #allocation10 [shape = 's32[1]{0}', space=sflag, size = 0x4, scoped, tag = 'scoped memory for tpu_custom_call.1']
    #allocation11 [shape = 'u8[4096]{0}', space=vmem, size = 0x1000, scoped, tag = 'output window, operand 0']
    %8 = vsyncpa [#allocation7], 0
    %9 = vsyncpa [#allocation10], 0
    %10 = vsyncpa [#allocation8], 0
    %s11 = scalar_lea.sflag [#allocation8], 1
    %12 = vsyncpa %s11, 0
    loop: start=0, step=1, limit=4
    $region2: #{tpu_custom_call.1} parent=1 // loop_pre_header
      _
    $region3: #{tpu_custom_call.1} parent=1 // loop_header
      %s14 = sphi 0, %s18
      %p15 = scmp.ge.s32.totalorder %s14, 4
      %s21 = sphi 0, %s33
      %s22 = sphi 0, %s29
      %s23 = sphi 0, %s21
      %s24 = sphi 0, %s22
      %s25 = sphi 0, %s23
      %s26 = sphi 0, %s24
      %s36 = sphi 0, %s38
      %s39 = sphi 0, %s36
      %s40 = sphi 0, %s39
      %s56 = sphi 0, %s40
      %s60 = sphi 0, %s60
      %s62 = sphi 0, %s60
      %s63 = sphi 0, %s62
      %s77 = sphi 0, %s63
      %s81 = sphi 0, %s81
      %s83 = sphi 0, %s81
      %s84 = sphi 0, %s83
      %s98 = sphi 0, %s84
      %s106 = sphi 0, %s108
      %s109 = sphi 0, %s106
      %s110 = sphi 0, %s109
      %s126 = sphi 0, %s110
    $region4: #{tpu_custom_call.1} parent=1 // loop_header_branch
      %17 = sbr.rel (%p15) target = $region8
    $region5: #{tpu_custom_call.1} parent=1 // loop_body
      %s19 = ssub.s32 %s14, 1
      %s20 = ssub.s32 %s14, 2
      %s27 = sadd.s32 1, %s22
      %p28 = scmp.ge.s32.totalorder %s27, 1
      %s29 = scalar_select %p28, 0, %s27
      %s30 = sadd.s32 1, %s21
      %s31 = scalar_select %p28, %s30, %s21
      %p32 = scmp.ge.s32.totalorder %s31, 2
      %s33 = scalar_select %p32, 0, %s31
      %s34 = ssub.s32 %s22, %s29
      %p35 = scmp.eq.s32.totalorder %s34, 0
      %s37 = sadd.s32 %s36, 1
      %s38 = scalar_select %p35, %s36, %s37
      %p41 = pneg %p35
      %p42 = scmp.eq.s32.totalorder %s14, 1
      %p43 = por %p41, %p42
      %p44 = scmp.ne.s32.totalorder %s36, %s39
      %p45 = scmp.eq.s32.totalorder %s14, 0
      %p46 = por %p44, %p45
      %p47 = scmp.ne.s32.totalorder %s36, %s39
      %p48 = scmp.eq.s32.totalorder %s19, 1
      %p49 = por %p47, %p48
      %p50 = scmp.ne.s32.totalorder %s39, %s40
      %p51 = scmp.eq.s32.totalorder %s19, 0
      %p52 = por %p50, %p51
      %p53 = scmp.ne.s32.totalorder %s39, %s40
      %p54 = scmp.eq.s32.totalorder %s20, 1
      %p55 = por %p53, %p54
      %p57 = scmp.ne.s32.totalorder %s40, %s56
      %p58 = scmp.eq.s32.totalorder %s20, 0
      %p59 = por %p57, %p58
      %s61 = sadd.s32 %s60, 1
      %p64 = scmp.eq.s32.totalorder %s14, 1
      %p65 = scmp.ne.s32.totalorder %s60, %s62
      %p66 = scmp.eq.s32.totalorder %s14, 0
      %p67 = por %p65, %p66
      %p68 = scmp.ne.s32.totalorder %s60, %s62
      %p69 = scmp.eq.s32.totalorder %s19, 1
      %p70 = por %p68, %p69
      %p71 = scmp.ne.s32.totalorder %s62, %s63
      %p72 = scmp.eq.s32.totalorder %s19, 0
      %p73 = por %p71, %p72
      %p74 = scmp.ne.s32.totalorder %s62, %s63
      %p75 = scmp.eq.s32.totalorder %s20, 1
      %p76 = por %p74, %p75
      %p78 = scmp.ne.s32.totalorder %s63, %s77
      %p79 = scmp.eq.s32.totalorder %s20, 0
      %p80 = por %p78, %p79
      %s82 = sadd.s32 %s81, 1
      %p85 = scmp.eq.s32.totalorder %s14, 1
      %p86 = scmp.ne.s32.totalorder %s81, %s83
      %p87 = scmp.eq.s32.totalorder %s14, 0
      %p88 = por %p86, %p87
      %p89 = scmp.ne.s32.totalorder %s81, %s83
      %p90 = scmp.eq.s32.totalorder %s19, 1
      %p91 = por %p89, %p90
      %p92 = scmp.ne.s32.totalorder %s83, %s84
      %p93 = scmp.eq.s32.totalorder %s19, 0
      %p94 = por %p92, %p93
      %p95 = scmp.ne.s32.totalorder %s83, %s84
      %p96 = scmp.eq.s32.totalorder %s20, 1
      %p97 = por %p95, %p96
      %p99 = scmp.ne.s32.totalorder %s84, %s98
      %p100 = scmp.eq.s32.totalorder %s20, 0
      %p101 = por %p99, %p100
      %s102 = smul.u32 %s22, %s21
      %s103 = smul.u32 %s29, %s33
      %s104 = ssub.s32 %s102, %s103
      %p105 = scmp.eq.s32.totalorder %s104, 0
      %s107 = sadd.s32 %s106, 1
      %s108 = scalar_select %p105, %s106, %s107
      %p111 = pneg %p105
      %p112 = scmp.eq.s32.totalorder %s14, 1
      %p113 = por %p111, %p112
      %p114 = scmp.ne.s32.totalorder %s106, %s109
      %p115 = scmp.eq.s32.totalorder %s14, 0
      %p116 = por %p114, %p115
      %p117 = scmp.ne.s32.totalorder %s106, %s109
      %p118 = scmp.eq.s32.totalorder %s19, 1
      %p119 = por %p117, %p118
      %p120 = scmp.ne.s32.totalorder %s109, %s110
      %p121 = scmp.eq.s32.totalorder %s19, 0
      %p122 = por %p120, %p121
      %p123 = scmp.ne.s32.totalorder %s109, %s110
      %p124 = scmp.eq.s32.totalorder %s20, 1
      %p125 = por %p123, %p124
      %p127 = scmp.ne.s32.totalorder %s110, %s126
      %p128 = scmp.eq.s32.totalorder %s20, 0
      %p129 = por %p127, %p128
      %p130 = scmp.le.s32.totalorder 1, %s14
      %p131 = scmp.lt.s32.totalorder %s14, 3
      %p132 = pnand %p130, %p131
      %p133 = pneg %p132
      // Predicated region
      $region9: #{tpu_custom_call.1} parent=5 // pred_check
        _
      $region10: #{tpu_custom_call.1} parent=5 // pred_check_branch
        %135 = sbr.rel (%p132) target = $region12
      $region11: #{tpu_custom_call.1} parent=5 // pred_region
        %s136 = ssub.s32 %s14, 1
        // Predicated region
        $region13: #{tpu_custom_call.1} parent=11 // pred_check
          %p137 = pneg %p52
        $region14: #{tpu_custom_call.1} parent=11 // pred_check_branch
          %139 = sbr.rel (%p137) target = $region16
        $region15: #{tpu_custom_call.1} parent=11 // pred_region
          %141 = vsyncadd [#allocation7], 0
          %s142 = smul.addr %s24, 4
          %s143 = scalar_lea.hbm %s0, %s142
          %s145 = sshll.u32 %s143, 4
          %s146 = int_to_ptr.hbm [resolvable:$true] %s145
          %s147 = sshll.u32 [#allocation6], 4
          %s148 = int_to_ptr.vmem [resolvable:$true] %s147
          %150 = dma.hbm_to_vmem [thread:$0]  %s146, 64, %s148, [#allocation7]
        $region16: #{tpu_custom_call.1} parent=11 // pred_fallthru
          _
        // Predicated region
        $region17: #{tpu_custom_call.1} parent=11 // pred_check
          %p151 = pneg %p73
        $region18: #{tpu_custom_call.1} parent=11 // pred_check_branch
          %153 = sbr.rel (%p151) target = $region20
        $region19: #{tpu_custom_call.1} parent=11 // pred_region
          %155 = vsyncadd [#allocation10], 0
          %s157 = sshll.u32 %s1, 4
          %s158 = int_to_ptr.hbm [resolvable:$true] %s157
          %s159 = sshll.u32 [#allocation9], 4
          %s160 = int_to_ptr.vmem [resolvable:$true] %s159
          %162 = dma.hbm_to_vmem [thread:$0]  %s158, 16, %s160, [#allocation10]
        $region20: #{tpu_custom_call.1} parent=11 // pred_fallthru
          _
        // Predicated region
        $region21: #{tpu_custom_call.1} parent=11 // pred_check
          %p163 = pneg %p94
        $region22: #{tpu_custom_call.1} parent=11 // pred_check_branch
          %165 = sbr.rel (%p163) target = $region24
        $region23: #{tpu_custom_call.1} parent=11 // pred_region
          _
        $region24: #{tpu_custom_call.1} parent=11 // pred_fallthru
          _
      $region12: #{tpu_custom_call.1} parent=5 // pred_fallthru
        _
      %p166 = scmp.lt.s32.totalorder %s14, 2
      // Predicated region
      $region25: #{tpu_custom_call.1} parent=5 // pred_check
        %p167 = pneg %p166
      $region26: #{tpu_custom_call.1} parent=5 // pred_check_branch
        %169 = sbr.rel (%p167) target = $region28
      $region27: #{tpu_custom_call.1} parent=5 // pred_region
        _
      $region28: #{tpu_custom_call.1} parent=5 // pred_fallthru
        _
      %p170 = scmp.le.s32.totalorder 1, %s14
      %p171 = scmp.lt.s32.totalorder %s14, 3
      %p172 = pnand %p170, %p171
      %p173 = pneg %p172
      // Predicated region
      $region29: #{tpu_custom_call.1} parent=5 // pred_check
        _
      $region30: #{tpu_custom_call.1} parent=5 // pred_check_branch
        %175 = sbr.rel (%p172) target = $region32
      $region31: #{tpu_custom_call.1} parent=5 // pred_region
        %s176 = ssub.s32 %s14, 1
        // Predicated region
        $region33: #{tpu_custom_call.1} parent=31 // pred_check
          %p177 = pneg %p52
        $region34: #{tpu_custom_call.1} parent=31 // pred_check_branch
          %179 = sbr.rel (%p177) target = $region36
        $region35: #{tpu_custom_call.1} parent=31 // pred_region
          %181 = dma.done [#allocation7], 64
        $region36: #{tpu_custom_call.1} parent=31 // pred_fallthru
          _
        // Predicated region
        $region37: #{tpu_custom_call.1} parent=31 // pred_check
          %p182 = pneg %p73
        $region38: #{tpu_custom_call.1} parent=31 // pred_check_branch
          %184 = sbr.rel (%p182) target = $region40
        $region39: #{tpu_custom_call.1} parent=31 // pred_region
          %186 = dma.done [#allocation10], 16
        $region40: #{tpu_custom_call.1} parent=31 // pred_fallthru
          _
        %p187 = pneg %p52
        %p188 = pneg %p49
        %p189 = pneg %p73
        %p190 = pneg %p70
        %p191 = pneg %p94
        %p192 = pneg %p91
        %p193 = pneg %p122
        %p194 = pneg %p119
        %s195 = sand.u32 %s109, 1
        %s196 = scalar_lea.sflag [#allocation8], %s195
        %s197 = sand.u32 %s109, 1
        %s198 = smul.addr %s197, 4
        %s199 = scalar_lea.vmem [#allocation11], %s198
        %s200 = smul.u32 %s24, %s23
        %p201 = scmp.eq.s32.totalorder %s23, 0
        %p202 = scmp.eq.s32.totalorder %s24, 0
        %p203 = pnand %p201, %p202
        %p204 = pneg %p203
        // Predicated region
        $region41: #{tpu_custom_call.1} parent=31 // pred_check
          _
        $region42: #{tpu_custom_call.1} parent=31 // pred_check_branch
          %206 = sbr.rel (%p203) target = $region44
        $region43: #{tpu_custom_call.1} parent=31 // pred_region
          %207 = vst [vmem:[#allocation2] sm:$0x1] 0.0
          %208 = vst [vmem:[#allocation3] sm:$0x1] 0.0
        $region44: #{tpu_custom_call.1} parent=31 // pred_fallthru
          _
        // Predicated region
        $region45: #{tpu_custom_call.1} parent=31 // pred_check
          %p209 = pneg %p201
        $region46: #{tpu_custom_call.1} parent=31 // pred_check_branch
          %211 = sbr.rel (%p209) target = $region48
        $region47: #{tpu_custom_call.1} parent=31 // pred_region
          %v212 = vld [vmem:[#allocation6] sm:$0xf]
          %v213 = vld [vmem:[#allocation2] sm:$0x1]
          %vm214 = vcmask 1043456
          %v215 = vsel %vm214, %v212, 0.0
          %v216 = vrot.slane %v215, 4
          %v217 = vadd.f32 %v215, %v216
          %v218 = vrot.slane %v217, 2
          %v219 = vadd.f32 %v217, %v218
          %v220 = vrot.slane %v219, 1
          %v221 = vadd.f32 %v219, %v220
          %v222 = vadd.f32 %v213, %v221
          %223 = vst [vmem:[#allocation2] sm:$0x1] %v222
          %v224 = vld [vmem:[#allocation3] sm:$0x1]
          %v225 = vmul.f32 %v212, %v212
          %v226 = vsel %vm214, %v225, 0.0
          %v227 = vrot.slane %v226, 4
          %v228 = vadd.f32 %v226, %v227
          %v229 = vrot.slane %v228, 2
          %v230 = vadd.f32 %v228, %v229
          %v231 = vrot.slane %v230, 1
          %v232 = vadd.f32 %v230, %v231
          %v233 = vadd.f32 %v224, %v232
          %234 = vst [vmem:[#allocation3] sm:$0x1] %v233
        $region48: #{tpu_custom_call.1} parent=31 // pred_fallthru
          _
        %p235 = scmp.eq.s32.totalorder %s23, 1
        %p236 = pnand %p235, %p202
        %p237 = pneg %p236
        // Predicated region
        $region49: #{tpu_custom_call.1} parent=31 // pred_check
          _
        $region50: #{tpu_custom_call.1} parent=31 // pred_check_branch
          %239 = sbr.rel (%p236) target = $region52
        $region51: #{tpu_custom_call.1} parent=31 // pred_region
          %v240 = vld [vmem:[#allocation2] sm:$0x1]
          %v241 = vld [vmem:[#allocation3] sm:$0x1]
          %v242 = vlaneseq
          %v243 = vshrl.u32 %v242, 7
          %v244 = vadd.s32 %v243, 8
          %v245 = vadd.s32 %v243, 16
          %v246 = vadd.s32 %v243, 24
          %v247 = vadd.s32 %v243, 32
          %v248 = vadd.s32 %v243, 40
          %v249 = vadd.s32 %v243, 48
          %v250 = vadd.s32 %v243, 56
          %v251 = vadd.s32 %v243, 64
          %v252 = vadd.s32 %v243, 72
          %v253 = vadd.s32 %v243, 80
          %v254 = vadd.s32 %v243, 88
          %v255 = vadd.s32 %v243, 96
          %v256 = vadd.s32 %v243, 104
          %v257 = vadd.s32 %v243, 112
          %v258 = vadd.s32 %v243, 120
          %vm259 = vcmp.lt.s32.totalorder %v243, 0
          %v260 = vsub.s32 0, %v243
          %v261 = vsel %vm259, %v260, %v243
          %v262 = vshrl.u32 %v261, 5
          %v263 = vand.u32 %v261, 31
          %v264 = vsub.s32 0, %v263
          %v265 = vsel %vm259, %v264, %v263
          %vm266 = vcmp.lt.s32.totalorder %v244, 0
          %v267 = vsub.s32 0, %v244
          %v268 = vsel %vm266, %v267, %v244
          %v269 = vshrl.u32 %v268, 5
          %v270 = vand.u32 %v268, 31
          %v271 = vsub.s32 0, %v270
          %v272 = vsel %vm266, %v271, %v270
          %vm273 = vcmp.lt.s32.totalorder %v245, 0
          %v274 = vsub.s32 0, %v245
          %v275 = vsel %vm273, %v274, %v245
          %v276 = vshrl.u32 %v275, 5
          %v277 = vand.u32 %v275, 31
          %v278 = vsub.s32 0, %v277
          %v279 = vsel %vm273, %v278, %v277
          %vm280 = vcmp.lt.s32.totalorder %v246, 0
          %v281 = vsub.s32 0, %v246
          %v282 = vsel %vm280, %v281, %v246
          %v283 = vshrl.u32 %v282, 5
          %v284 = vand.u32 %v282, 31
          %v285 = vsub.s32 0, %v284
          %v286 = vsel %vm280, %v285, %v284
          %vm287 = vcmp.lt.s32.totalorder %v247, 0
          %v288 = vsub.s32 0, %v247
          %v289 = vsel %vm287, %v288, %v247
          %v290 = vshrl.u32 %v289, 5
          %v291 = vand.u32 %v289, 31
          %v292 = vsub.s32 0, %v291
          %v293 = vsel %vm287, %v292, %v291
          %vm294 = vcmp.lt.s32.totalorder %v248, 0
          %v295 = vsub.s32 0, %v248
          %v296 = vsel %vm294, %v295, %v248
          %v297 = vshrl.u32 %v296, 5
          %v298 = vand.u32 %v296, 31
          %v299 = vsub.s32 0, %v298
          %v300 = vsel %vm294, %v299, %v298
          %vm301 = vcmp.lt.s32.totalorder %v249, 0
          %v302 = vsub.s32 0, %v249
          %v303 = vsel %vm301, %v302, %v249
          %v304 = vshrl.u32 %v303, 5
          %v305 = vand.u32 %v303, 31
          %v306 = vsub.s32 0, %v305
          %v307 = vsel %vm301, %v306, %v305
          %vm308 = vcmp.lt.s32.totalorder %v250, 0
          %v309 = vsub.s32 0, %v250
          %v310 = vsel %vm308, %v309, %v250
          %v311 = vshrl.u32 %v310, 5
          %v312 = vand.u32 %v310, 31
          %v313 = vsub.s32 0, %v312
          %v314 = vsel %vm308, %v313, %v312
          %vm315 = vcmp.lt.s32.totalorder %v251, 0
          %v316 = vsub.s32 0, %v251
          %v317 = vsel %vm315, %v316, %v251
          %v318 = vshrl.u32 %v317, 5
          %v319 = vand.u32 %v317, 31
          %v320 = vsub.s32 0, %v319
          %v321 = vsel %vm315, %v320, %v319
          %vm322 = vcmp.lt.s32.totalorder %v252, 0
          %v323 = vsub.s32 0, %v252
          %v324 = vsel %vm322, %v323, %v252
          %v325 = vshrl.u32 %v324, 5
          %v326 = vand.u32 %v324, 31
          %v327 = vsub.s32 0, %v326
          %v328 = vsel %vm322, %v327, %v326
          %vm329 = vcmp.lt.s32.totalorder %v253, 0
          %v330 = vsub.s32 0, %v253
          %v331 = vsel %vm329, %v330, %v253
          %v332 = vshrl.u32 %v331, 5
          %v333 = vand.u32 %v331, 31
          %v334 = vsub.s32 0, %v333
          %v335 = vsel %vm329, %v334, %v333
          %vm336 = vcmp.lt.s32.totalorder %v254, 0
          %v337 = vsub.s32 0, %v254
          %v338 = vsel %vm336, %v337, %v254
          %v339 = vshrl.u32 %v338, 5
          %v340 = vand.u32 %v338, 31
          %v341 = vsub.s32 0, %v340
          %v342 = vsel %vm336, %v341, %v340
          %vm343 = vcmp.lt.s32.totalorder %v255, 0
          %v344 = vsub.s32 0, %v255
          %v345 = vsel %vm343, %v344, %v255
          %v346 = vshrl.u32 %v345, 5
          %v347 = vand.u32 %v345, 31
          %v348 = vsub.s32 0, %v347
          %v349 = vsel %vm343, %v348, %v347
          %vm350 = vcmp.lt.s32.totalorder %v256, 0
          %v351 = vsub.s32 0, %v256
          %v352 = vsel %vm350, %v351, %v256
          %v353 = vshrl.u32 %v352, 5
          %v354 = vand.u32 %v352, 31
          %v355 = vsub.s32 0, %v354
          %v356 = vsel %vm350, %v355, %v354
          %vm357 = vcmp.lt.s32.totalorder %v257, 0
          %v358 = vsub.s32 0, %v257
          %v359 = vsel %vm357, %v358, %v257
          %v360 = vshrl.u32 %v359, 5
          %v361 = vand.u32 %v359, 31
          %v362 = vsub.s32 0, %v361
          %v363 = vsel %vm357, %v362, %v361
          %vm364 = vcmp.lt.s32.totalorder %v258, 0
          %v365 = vsub.s32 0, %v258
          %v366 = vsel %vm364, %v365, %v258
          %v367 = vshrl.u32 %v366, 5
          %v368 = vand.u32 %v366, 31
          %v369 = vsub.s32 0, %v368
          %v370 = vsel %vm364, %v369, %v368
          %vm371 = vcmp.ne.s32.totalorder %v265, 0
          %vm372 = vcmp.ne.s32.totalorder %v272, 0
          %vm373 = vcmp.ne.s32.totalorder %v279, 0
          %vm374 = vcmp.ne.s32.totalorder %v286, 0
          %vm375 = vcmp.ne.s32.totalorder %v293, 0
          %vm376 = vcmp.ne.s32.totalorder %v300, 0
          %vm377 = vcmp.ne.s32.totalorder %v307, 0
          %vm378 = vcmp.ne.s32.totalorder %v314, 0
          %vm379 = vcmp.ne.s32.totalorder %v321, 0
          %vm380 = vcmp.ne.s32.totalorder %v328, 0
          %vm381 = vcmp.ne.s32.totalorder %v335, 0
          %vm382 = vcmp.ne.s32.totalorder %v342, 0
          %vm383 = vcmp.ne.s32.totalorder %v349, 0
          %vm384 = vcmp.ne.s32.totalorder %v356, 0
          %vm385 = vcmp.ne.s32.totalorder %v363, 0
          %vm386 = vcmp.ne.s32.totalorder %v370, 0
          %vm387 = vcmp.lt.s32.totalorder %v265, 0
          %vm388 = vcmp.lt.s32.totalorder %v272, 0
          %vm389 = vcmp.lt.s32.totalorder %v279, 0
          %vm390 = vcmp.lt.s32.totalorder %v286, 0
          %vm391 = vcmp.lt.s32.totalorder %v293, 0
          %vm392 = vcmp.lt.s32.totalorder %v300, 0
          %vm393 = vcmp.lt.s32.totalorder %v307, 0
          %vm394 = vcmp.lt.s32.totalorder %v314, 0
          %vm395 = vcmp.lt.s32.totalorder %v321, 0
          %vm396 = vcmp.lt.s32.totalorder %v328, 0
          %vm397 = vcmp.lt.s32.totalorder %v335, 0
          %vm398 = vcmp.lt.s32.totalorder %v342, 0
          %vm399 = vcmp.lt.s32.totalorder %v349, 0
          %vm400 = vcmp.lt.s32.totalorder %v356, 0
          %vm401 = vcmp.lt.s32.totalorder %v363, 0
          %vm402 = vcmp.lt.s32.totalorder %v370, 0
          %vm403 = vmand %vm387, %vm371
          %vm404 = vmand %vm388, %vm372
          %vm405 = vmand %vm389, %vm373
          %vm406 = vmand %vm390, %vm374
          %vm407 = vmand %vm391, %vm375
          %vm408 = vmand %vm392, %vm376
          %vm409 = vmand %vm393, %vm377
          %vm410 = vmand %vm394, %vm378
          %vm411 = vmand %vm395, %vm379
          %vm412 = vmand %vm396, %vm380
          %vm413 = vmand %vm397, %vm381
          %vm414 = vmand %vm398, %vm382
          %vm415 = vmand %vm399, %vm383
          %vm416 = vmand %vm400, %vm384
          %vm417 = vmand %vm401, %vm385
          %vm418 = vmand %vm402, %vm386
          %v419 = vadd.s32 %v265, 32
          %v420 = vadd.s32 %v272, 32
          %v421 = vadd.s32 %v279, 32
          %v422 = vadd.s32 %v286, 32
          %v423 = vadd.s32 %v293, 32
          %v424 = vadd.s32 %v300, 32
          %v425 = vadd.s32 %v307, 32
          %v426 = vadd.s32 %v314, 32
          %v427 = vadd.s32 %v321, 32
          %v428 = vadd.s32 %v328, 32
          %v429 = vadd.s32 %v335, 32
          %v430 = vadd.s32 %v342, 32
          %v431 = vadd.s32 %v349, 32
          %v432 = vadd.s32 %v356, 32
          %v433 = vadd.s32 %v363, 32
          %v434 = vadd.s32 %v370, 32
          %v435 = vsel %vm403, %v419, %v265
          %v436 = vsel %vm404, %v420, %v272
          %v437 = vsel %vm405, %v421, %v279
          %v438 = vsel %vm406, %v422, %v286
          %v439 = vsel %vm407, %v423, %v293
          %v440 = vsel %vm408, %v424, %v300
          %v441 = vsel %vm409, %v425, %v307
          %v442 = vsel %vm410, %v426, %v314
          %v443 = vsel %vm411, %v427, %v321
          %v444 = vsel %vm412, %v428, %v328
          %v445 = vsel %vm413, %v429, %v335
          %v446 = vsel %vm414, %v430, %v342
          %v447 = vsel %vm415, %v431, %v349
          %v448 = vsel %vm416, %v432, %v356
          %v449 = vsel %vm417, %v433, %v363
          %v450 = vsel %vm418, %v434, %v370
          %v451 = vlaneseq
          %v452 = vand.u32 %v451, 127
          %vm453 = vcmp.lt.s32.totalorder %v452, 0
          %v454 = vsub.s32 0, %v452
          %v455 = vsel %vm453, %v454, %v452
          %v456 = vshrl.u32 %v455, 5
          %v457 = vand.u32 %v455, 31
          %v458 = vsub.s32 0, %v457
          %v459 = vsel %vm453, %v458, %v457
          %vm460 = vcmp.ne.s32.totalorder %v459, 0
          %vm461 = vcmp.lt.s32.totalorder %v459, 0
          %vm462 = vmand %vm461, %vm460
          %v463 = vadd.s32 %v459, 32
          %v464 = vsel %vm462, %v463, %v459
          %vm465 = vcmp.eq.s32.totalorder %v435, %v464
          %vm466 = vcmp.eq.s32.totalorder %v436, %v464
          %vm467 = vcmp.eq.s32.totalorder %v437, %v464
          %vm468 = vcmp.eq.s32.totalorder %v438, %v464
          %vm469 = vcmp.eq.s32.totalorder %v439, %v464
          %vm470 = vcmp.eq.s32.totalorder %v440, %v464
          %vm471 = vcmp.eq.s32.totalorder %v441, %v464
          %vm472 = vcmp.eq.s32.totalorder %v442, %v464
          %vm473 = vcmp.eq.s32.totalorder %v443, %v464
          %vm474 = vcmp.eq.s32.totalorder %v444, %v464
          %vm475 = vcmp.eq.s32.totalorder %v445, %v464
          %vm476 = vcmp.eq.s32.totalorder %v446, %v464
          %vm477 = vcmp.eq.s32.totalorder %v447, %v464
          %vm478 = vcmp.eq.s32.totalorder %v448, %v464
          %vm479 = vcmp.eq.s32.totalorder %v449, %v464
          %vm480 = vcmp.eq.s32.totalorder %v450, %v464
          %v481 = vsel %vm465, 1, 0
          %v482 = vsel %vm466, 1, 0
          %v483 = vsel %vm467, 1, 0
          %v484 = vsel %vm468, 1, 0
          %v485 = vsel %vm469, 1, 0
          %v486 = vsel %vm470, 1, 0
          %v487 = vsel %vm471, 1, 0
          %v488 = vsel %vm472, 1, 0
          %v489 = vsel %vm473, 1, 0
          %v490 = vsel %vm474, 1, 0
          %v491 = vsel %vm475, 1, 0
          %v492 = vsel %vm476, 1, 0
          %v493 = vsel %vm477, 1, 0
          %v494 = vsel %vm478, 1, 0
          %v495 = vsel %vm479, 1, 0
          %v496 = vsel %vm480, 1, 0
          %v497 = vcvt.s32.f32 %v481
          %v498 = vcvt.s32.f32 %v482
          %v499 = vcvt.s32.f32 %v483
          %v500 = vcvt.s32.f32 %v484
          %v501 = vcvt.s32.f32 %v485
          %v502 = vcvt.s32.f32 %v486
          %v503 = vcvt.s32.f32 %v487
          %v504 = vcvt.s32.f32 %v488
          %v505 = vcvt.s32.f32 %v489
          %v506 = vcvt.s32.f32 %v490
          %v507 = vcvt.s32.f32 %v491
          %v508 = vcvt.s32.f32 %v492
          %v509 = vcvt.s32.f32 %v493
          %v510 = vcvt.s32.f32 %v494
          %v511 = vcvt.s32.f32 %v495
          %v512 = vcvt.s32.f32 %v496
          %513 = vmatpush.msra.mxu0 %v512
          %514 = vmatpush.msra.mxu0 %v511
          %515 = vmatpush.msra.mxu0 %v510
          %516 = vmatpush.msra.mxu0 %v509
          %517 = vmatpush.msra.mxu0 %v508
          %518 = vmatpush.msra.mxu0 %v507
          %519 = vmatpush.msra.mxu0 %v506
          %520 = vmatpush.msra.mxu0 %v505
          %521 = vmatpush.msra.mxu0 %v504
          %522 = vmatpush.msra.mxu0 %v503
          %523 = vmatpush.msra.mxu0 %v502
          %524 = vmatpush.msra.mxu0 %v501
          %525 = vmatpush.msra.mxu0 %v500
          %526 = vmatpush.msra.mxu0 %v499
          %527 = vmatpush.msra.mxu0 %v498
          %528 = vmatpush.msra.mxu0 %v497
          %529 = vmatmul.f32.gmra.mxu0 %v240
          %v530 = vpop.f32.mrf.mxu0
          %v531 = vadd.f32 0.0, %v530
          %532 = vdwg.mxu0
          %533 = vmatpush.msra.mxu0 %v512
          %534 = vmatpush.msra.mxu0 %v511
          %535 = vmatpush.msra.mxu0 %v510
          %536 = vmatpush.msra.mxu0 %v509
          %537 = vmatpush.msra.mxu0 %v508
          %538 = vmatpush.msra.mxu0 %v507
          %539 = vmatpush.msra.mxu0 %v506
          %540 = vmatpush.msra.mxu0 %v505
          %541 = vmatpush.msra.mxu0 %v504
          %542 = vmatpush.msra.mxu0 %v503
          %543 = vmatpush.msra.mxu0 %v502
          %544 = vmatpush.msra.mxu0 %v501
          %545 = vmatpush.msra.mxu0 %v500
          %546 = vmatpush.msra.mxu0 %v499
          %547 = vmatpush.msra.mxu0 %v498
          %548 = vmatpush.msra.mxu0 %v497
          %549 = vmatmul.f32.gmra.mxu0 %v241
          %v550 = vpop.f32.mrf.mxu0
          %v551 = vadd.f32 0.0, %v550
          %552 = vdwg.mxu0
          %v553 = vmul.f32 %v531, 0.0625
          %v554 = vmul.f32 %v551, 0.0625
          %v555 = vmul.f32 %v553, %v553
          %v556 = vsub.f32 %v554, %v555
          %v557 = vmax.f32 %v556, 0.0
          %v558 = vadd.f32 %v557, 1e-05
          %v559 = vrsqrt.pop %v558
          %v560 = vmul.f32 %v559, %v558
          %v561 = vmul.f32 %v560, %v559
          %v562 = vmul.f32 0.5, %v561
          %v563 = vsub.f32 1.5, %v562
          %v564 = vmul.f32 %v559, %v563
          %vm565 = vweird.f32 %v558
          %vm566 = vweird.f32 %v559
          %vm567 = vmor %vm565, %vm566
          %v568 = vsel %vm567, %v559, %v564
          %v569 = vld [vmem:[#allocation9] sm:$0x1]
          %v570 = vmul.f32 %v569, %v568
          %571 = vst [vmem:[#allocation4] sm:$0x1] %v570
          %v572 = vld [vmem:[%s2] sm:$0x1]
          %v573 = vmul.f32 %v553, %v570
          %v574 = vsub.f32 %v572, %v573
          %575 = vst [vmem:[#allocation5] sm:$0x1] %v574
        $region52: #{tpu_custom_call.1} parent=31 // pred_fallthru
          _
        // Predicated region
        $region53: #{tpu_custom_call.1} parent=31 // pred_check
          %p576 = pneg %p235
        $region54: #{tpu_custom_call.1} parent=31 // pred_check_branch
          %578 = sbr.rel (%p576) target = $region56
        $region55: #{tpu_custom_call.1} parent=31 // pred_region
          %v579 = vld [vmem:[#allocation6] sm:$0xf]
          %v580 = vld [vmem:[#allocation4] sm:$0x1]
          %v582 = vperm.slane %v580, 0
          %v584 = vmul.f32 %v579, %v582
          %v585 = vld [vmem:[#allocation5] sm:$0x1]
          %v587 = vperm.slane %v585, 0
          %v589 = vadd.f32 %v584, %v587
          %590 = vst [vmem:[%s199] sm:$0xf] %v589
        $region56: #{tpu_custom_call.1} parent=31 // pred_fallthru
          _
        %s591 = sand.u32 %s109, 1
        %s592 = scalar_lea.sflag [#allocation8], %s591
        %s593 = sand.u32 %s109, 1
        %s594 = smul.addr %s593, 4
        %s595 = scalar_lea.vmem [#allocation11], %s594
        // Predicated region
        $region57: #{tpu_custom_call.1} parent=31 // pred_check
          %p596 = pneg %p119
        $region58: #{tpu_custom_call.1} parent=31 // pred_check_branch
          %598 = sbr.rel (%p596) target = $region60
        $region59: #{tpu_custom_call.1} parent=31 // pred_region
          %s599 = smul.u32 %s24, %s23
          %601 = vsyncadd %s592, 0
          %s602 = smul.addr %s599, 4
          %s603 = scalar_lea.hbm %s3, %s602
          %s605 = sshll.u32 %s595, 4
          %s606 = int_to_ptr.vmem [resolvable:$true] %s605
          %s607 = sshll.u32 %s603, 4
          %s608 = int_to_ptr.hbm [resolvable:$true] %s607
          %610 = dma.vmem_to_hbm [thread:$0]  %s606, 64, %s608, %s592
        $region60: #{tpu_custom_call.1} parent=31 // pred_fallthru
          _
      $region32: #{tpu_custom_call.1} parent=5 // pred_fallthru
        _
      %p611 = scmp.le.s32.totalorder 2, %s14
      // Predicated region
      $region61: #{tpu_custom_call.1} parent=5 // pred_check
        %p612 = pneg %p611
      $region62: #{tpu_custom_call.1} parent=5 // pred_check_branch
        %614 = sbr.rel (%p612) target = $region64
      $region63: #{tpu_custom_call.1} parent=5 // pred_region
        %s615 = ssub.s32 %s14, 2
        // Predicated region
        $region65: #{tpu_custom_call.1} parent=63 // pred_check
          %p616 = pneg %p125
        $region66: #{tpu_custom_call.1} parent=63 // pred_check_branch
          %618 = sbr.rel (%p616) target = $region68
        $region67: #{tpu_custom_call.1} parent=63 // pred_region
          %s619 = sand.u32 %s110, 1
          %s620 = scalar_lea.sflag [#allocation8], %s619
          %s621 = sand.u32 %s110, 1
          %s622 = smul.addr %s621, 4
          %s623 = scalar_lea.vmem [#allocation11], %s622
          %625 = dma.done %s620, 64
        $region68: #{tpu_custom_call.1} parent=63 // pred_fallthru
          _
      $region64: #{tpu_custom_call.1} parent=5 // pred_fallthru
        _
    $region6: #{tpu_custom_call.1} parent=1 // loop_footer
      %s18 = sadd.s32 1, %s14
    $region7: #{tpu_custom_call.1} parent=1 // loop_footer_branch
      %13 = sbr.rel target = $region3
    $region8: #{tpu_custom_call.1} parent=1 // loop_exit
      _
    %626 = vsyncpa [#allocation7], 1
    %s627 = scalar_lea.sflag [#allocation7], 1
    %628 = vsyncpa %s627, 1
    %629 = vsyncpa [#allocation10], 1
    %630 = vsyncpa [#allocation8], 1
    %s631 = scalar_lea.sflag [#allocation8], 1
    %632 = vsyncpa %s631, 1

</llo_original>
